<compile_context>
chip_gen: v7x
topology: tpu7x:2x2x1
jax: 0.10.0
libtpu: 0.0.40
codegen_flags: <defaults>
</compile_context>

<pallas_src>
import functools

import jax
import jax.numpy as jnp
from jax import lax
from jax.experimental import pallas as pl
from jax.experimental.pallas import tpu as pltpu

LANES = 128
SUBLANES = 8

_OBJECTIVE_DTYPE = {
    "accuracy": jnp.float32,     # torch.float32
    "half": jnp.bfloat16,        # TPU-native half (torch uses float16)
    "performance": jnp.int8,     # int8 + per-term scale folded into query weights
}


# --------------------------------------------------------------------------- config
def _device_kind():
    try:
        return jax.devices()[0].device_kind.lower()
    except Exception:
        return ""


def _is_v7():
    return "v7" in _device_kind()


def _default_num_doc_shards():
    # v7x: 2 TensorCores/chip -> one doc shard per core ("parallel" grid axis).
    # v5e/v6e: 1 TC -> a shard axis is just a serial loop (extra steps + a second
    # finalize), so default to a single shard with larger gather DMAs.
    return 2 if _is_v7() else 1


def _vmem_cap_bytes():
    # v7x has only 64 MiB VMEM per TensorCore -> ~40 MiB scoped budget per core.
    # v5e/v6e have 128 MiB physical -> spend it on bigger tiles / deeper pipelining.
    return (40 << 20) if _is_v7() else (100 << 20)


# ------------------------------------------------------------------- in-kernel top-k
def _emit_topk(acc, doc_start, *, top_k, num_docs, padded_num_docs):
    """Iteratively extract top_k (value, global doc id) from one shard's (rows, 128)
    accumulator.  Reductions run sublane-first (axis=0 -> mostly VALU vreg folds) and
    only then across lanes (axis=1 -> a single XLU reduce) to keep the scarce XLU slot
    off the critical path."""
    rows, lanes = acc.shape
    row_iota = lax.broadcasted_iota(jnp.int32, (rows, lanes), 0)
    lane_iota = lax.broadcasted_iota(jnp.int32, (rows, lanes), 1)
    doc_iota = doc_start + row_iota * lanes + lane_iota          # global doc ids
    acc = jnp.where(doc_iota < num_docs, acc, -jnp.inf)          # mask doc padding
    k_iota = lax.broadcasted_iota(jnp.int32, (SUBLANES, LANES), 1)
    topv = jnp.full((SUBLANES, LANES), -jnp.inf, jnp.float32)
    topi = jnp.zeros((SUBLANES, LANES), jnp.int32)
    # TODO(synk): a two-stage per-lane-champion top-k (one full pass + k column
    # refills) would cut the per-iteration full-tile work further on huge shards.
    for j in range(top_k):
        m = jnp.max(acc, axis=0, keepdims=True)                  # (1, 128) sublane-first
        m = jnp.max(m, axis=1, keepdims=True)                    # (1, 1)
        cand = jnp.where(acc == m, doc_iota, padded_num_docs)
        idx = jnp.min(cand, axis=0, keepdims=True)
        idx = jnp.min(idx, axis=1, keepdims=True)                # lowest doc id at max
        topv = jnp.where(k_iota == j, m, topv)
        topi = jnp.where(k_iota == j, idx, topi)
        acc = jnp.where(doc_iota == idx, -jnp.inf, acc)
    return topv, topi


# ----------------------------------------------------------------------- kernels
def _streaming_kernel(qidx_ref, qval_ref, *refs, top_k, num_docs, padded_num_docs,
                      terms_per_step):
    """grid = (doc_shard [parallel], query-term block [arbitrary / reduction])."""
    T = terms_per_step
    col_refs = refs[:T]                       # T gathered term rows, each (1, rows, 128)
    topv_ref = refs[T]                        # (1, 8, 128)
    topi_ref = refs[T + 1]                    # (1, 8, 128)
    acc_ref = refs[T + 2]                     # (rows, 128) f32 scratch

    d = pl.program_id(0)                      # doc shard
    s = pl.program_id(1)                      # query-term block (reduction axis)

    @pl.when(s == 0)
    def _init():
        acc_ref[...] = jnp.zeros_like(acc_ref)

    # accumulated.index_add_ on the densified column: acc += col[term] * qval, T/step.
    base = s * T
    contrib = col_refs[0][0].astype(jnp.float32) * qval_ref[base]
    for t in range(1, T):
        contrib = contrib + col_refs[t][0].astype(jnp.float32) * qval_ref[base + t]
    acc_ref[...] += contrib
    # TODO(synk): if the cast+mul+add chain becomes VALU-bound on v7x (2x HBM/TC),
    # route the T-term weighted sum through the MXU (qval as a (1,T) lhs).

    @pl.when(s == pl.num_programs(1) - 1)
    def _finalize():
        doc_start = d * (acc_ref.shape[0] * LANES)
        topv, topi = _emit_topk(acc_ref[...], doc_start, top_k=top_k,
                                num_docs=num_docs, padded_num_docs=padded_num_docs)
        topv_ref[0] = topv
        topi_ref[0] = topi


def _resident_kernel(qidx_ref, qval_ref, col_ref, topv_ref, topi_ref, acc_ref, *,
                     top_k, num_docs, padded_num_docs, padded_nnz):
    """Small-corpus fast path: the whole (num_terms, rows, 128) collection is VMEM
    resident; loop the query terms from SMEM (no per-term HBM gathers / grid steps)."""
    acc_ref[...] = jnp.zeros_like(acc_ref)

    def body(i, carry):
        t = qidx_ref[i]                                           # SMEM scalar read
        acc_ref[...] += col_ref[t].astype(jnp.float32) * qval_ref[i]
        return carry

    lax.fori_loop(0, padded_nnz, body, 0)

    topv, topi = _emit_topk(acc_ref[...], 0, top_k=top_k, num_docs=num_docs,
                            padded_num_docs=padded_num_docs)
    topv_ref[0] = topv
    topi_ref[0] = topi


# ---------------------------------------------------------------- host-side prep
def prepare_collection(collection, objective="accuracy", num_doc_shards=None):
    """One-time host-side prep of the densified CSC collection (mirrors the torch
    module's CSR->CSC + dtype conversion done in __init__).

    collection: dense (num_terms, num_docs) f32; collection[t, d] = weight of term t
    in doc d (0 where no posting).  Stored term-major, doc-padded and doc-sharded as
    (num_terms, num_doc_shards * rows_per_shard, 128) in the objective's storage dtype.
    """
    if objective not in _OBJECTIVE_DTYPE:
        raise RuntimeError(f"Objective mode {objective} is not supported")
    storage_dtype = _OBJECTIVE_DTYPE[objective]
    if num_doc_shards is None:
        num_doc_shards = _default_num_doc_shards()

    num_terms, num_docs = collection.shape
    itemsize = jnp.dtype(storage_dtype).itemsize
    sublane_align = max(SUBLANES, 32 // itemsize)     # 8 (f32) / 16 (bf16) / 32 (int8)
    rows = -(-num_docs // LANES)
    rows_per_shard = -(-rows // num_doc_shards)
    rows_per_shard = -(-rows_per_shard // sublane_align) * sublane_align
    total_rows = rows_per_shard * num_doc_shards
    padded_docs = total_rows * LANES
    assert padded_docs < 2 ** 31, "doc ids are int32"

    coll = jnp.asarray(collection, jnp.float32)
    prepared = dict(num_docs=num_docs, num_doc_shards=num_doc_shards,
                    rows_per_shard=rows_per_shard, objective=objective)
    if objective == "performance":
        # int8 with a per-term scale folded into the query weight at query time.
        # TODO(synk): torch's 'performance' mode accumulates in uint8 (wraparound);
        # that lossy behaviour is intentionally not replicated.
        max_abs = jnp.max(jnp.abs(coll), axis=1)
        scale = jnp.where(max_abs > 0, max_abs / 127.0, 1.0).astype(jnp.float32)
        col = jnp.clip(jnp.round(coll / scale[:, None]), -127, 127).astype(jnp.int8)
        prepared["term_scale"] = scale
    else:
        col = coll.astype(storage_dtype)
    col = jnp.pad(col, ((0, 0), (0, padded_docs - num_docs)))
    prepared["col3"] = col.reshape(num_terms, total_rows, LANES)
    return prepared


# ------------------------------------------------------------------- path runners
def _pad_terms(qidx, qval, padded_nnz):
    nnz = qidx.shape[0]
    return (jnp.pad(qidx, (0, padded_nnz - nnz)),     # padded terms -> term 0
            jnp.pad(qval, (0, padded_nnz - nnz)))     # padded weights -> 0


def _resident_vmem_needed(col3):
    _, total_rows, _ = col3.shape
    col_bytes = jnp.dtype(col3.dtype).itemsize
    return (col3.size * col_bytes                     # resident collection
            + total_rows * LANES * 4                  # f32 accumulator
            + 8 * total_rows * LANES * 4              # finalize temporaries headroom
            + 4 * SUBLANES * LANES * 4)               # output blocks


def _run_resident(qidx, qval, col3, *, top_k, num_docs, vmem_cap):
    num_terms, total_rows, _ = col3.shape
    padded_num_docs = total_rows * LANES
    nnz = int(qidx.shape[0])
    padded_nnz = max(1, int(pl.next_power_of_2(max(nnz, 1))))   # bucket -> no recompiles
    qidx, qval = _pad_terms(qidx, qval, padded_nnz)

    vmem_limit = int(min(max(2 * _resident_vmem_needed(col3), 8 << 20), vmem_cap))
    kernel = functools.partial(_resident_kernel, top_k=top_k, num_docs=num_docs,
                               padded_num_docs=padded_num_docs, padded_nnz=padded_nnz)

    topv, topi = pl.pallas_call(
        kernel,
        out_shape=(jax.ShapeDtypeStruct((1, SUBLANES, LANES), jnp.float32),
                   jax.ShapeDtypeStruct((1, SUBLANES, LANES), jnp.int32)),
        grid_spec=pltpu.PrefetchScalarGridSpec(
            num_scalar_prefetch=2,                   # query term ids + weights (SMEM)
            grid=(1,),
            in_specs=[pl.BlockSpec((num_terms, total_rows, LANES),
                                   lambda i, qidx_ref, qval_ref: (0, 0, 0))],
            out_specs=(pl.BlockSpec((1, SUBLANES, LANES),
                                    lambda i, qidx_ref, qval_ref: (0, 0, 0)),
                       pl.BlockSpec((1, SUBLANES, LANES),
                                    lambda i, qidx_ref, qval_ref: (0, 0, 0))),
            scratch_shapes=[pltpu.VMEM((total_rows, LANES), jnp.float32)],
        ),
        compiler_params=pltpu.CompilerParams(
            dimension_semantics=("arbitrary",),
            vmem_limit_bytes=vmem_limit),
    )(qidx, qval, col3)
    return topv[0, 0, :top_k], topi[0, 0, :top_k]


def _run_streaming(qidx, qval, col3, *, num_shards, rows_per_shard, top_k, num_docs,
                   terms_per_step, vmem_cap):
    num_terms = col3.shape[0]
    padded_num_docs = num_shards * rows_per_shard * LANES
    col_bytes = jnp.dtype(col3.dtype).itemsize
    block_bytes = rows_per_shard * LANES * col_bytes

    def vmem_needed(T):
        return (T * 2 * block_bytes                   # double-buffered row gathers
                + rows_per_shard * LANES * 4          # f32 accumulator scratch
                + 6 * rows_per_shard * LANES * 4      # finalize temporaries headroom
                + 2 * 2 * SUBLANES * LANES * 4)       # double-buffered output blocks

    T = max(1, int(terms_per_step))
    while T > 1 and vmem_needed(T) > int(0.8 * vmem_cap):
        T //= 2
    # TODO(synk): if even T=1 overflows the per-core budget (huge corpora), shard docs
    # beyond the TensorCore count and merge more candidates outside the kernel.
    vmem_limit = int(min(max(2 * vmem_needed(T), 16 << 20), vmem_cap))

    nnz = int(qidx.shape[0])
    padded_nnz = max(T, int(pl.next_power_of_2(max(nnz, 1))))   # bucket -> no recompiles
    padded_nnz = -(-padded_nnz // T) * T
    qidx, qval = _pad_terms(qidx, qval, padded_nnz)
    num_steps = padded_nnz // T

    kernel = functools.partial(_streaming_kernel, top_k=top_k, num_docs=num_docs,
                               padded_num_docs=padded_num_docs, terms_per_step=T)

    # T data-dependent row gathers per step: block index = query term id from SMEM.
    col_specs = [
        pl.BlockSpec((1, rows_per_shard, LANES),
                     (lambda d, s, qidx_ref, qval_ref, t=t: (qidx_ref[s * T + t], d, 0)))
        for t in range(T)
    ]
    out_specs = (
        pl.BlockSpec((1, SUBLANES, LANES), lambda d, s, qidx_ref, qval_ref: (d, 0, 0)),
        pl.BlockSpec((1, SUBLANES, LANES), lambda d, s, qidx_ref, qval_ref: (d, 0, 0)),
    )

    topv, topi = pl.pallas_call(
        kernel,
        out_shape=(jax.ShapeDtypeStruct((num_shards, SUBLANES, LANES), jnp.float32),
                   jax.ShapeDtypeStruct((num_shards, SUBLANES, LANES), jnp.int32)),
        grid_spec=pltpu.PrefetchScalarGridSpec(
            num_scalar_prefetch=2,                    # query term ids + weights (SMEM)
            grid=(num_shards, num_steps),             # term axis innermost (reduction)
            in_specs=col_specs,
            out_specs=out_specs,
            scratch_shapes=[pltpu.VMEM((rows_per_shard, LANES), jnp.float32)],
        ),
        compiler_params=pltpu.CompilerParams(
            dimension_semantics=("parallel", "arbitrary"),
            vmem_limit_bytes=vmem_limit),
    )(qidx, qval, *([col3] * T))

    # Merge the num_shards * top_k per-shard candidates (trivial, outside the kernel).
    cand_v = topv[:, 0, :top_k].reshape(-1)
    cand_i = topi[:, 0, :top_k].reshape(-1)
    merged_v, order = lax.top_k(cand_v, top_k)
    return merged_v, cand_i[order]


# --------------------------------------------------------------------- public API
def csr_sparse_retrieval_topk(indices, values, prepared, top_k=10, terms_per_step=8,
                              force_streaming=False):
    """indices: (1, nnz) int, values: (1, nnz) float (the module's pre-squeeze query).
    Returns (topk_values (top_k,), topk_indices (top_k,)) like torch.topk."""
    col3 = prepared["col3"]
    num_docs = prepared["num_docs"]
    num_shards = prepared["num_doc_shards"]
    rows_per_shard = prepared["rows_per_shard"]
    num_terms = col3.shape[0]
    assert 0 < top_k <= LANES, "top_k is limited to <= 128 by the output layout"

    qidx = jnp.clip(indices.reshape(-1).astype(jnp.int32), 0, num_terms - 1)
    qval = values.reshape(-1).astype(jnp.float32)
    if "term_scale" in prepared:                      # int8 storage: fold dequant scale
        qval = qval * prepared["term_scale"][qidx]

    vmem_cap = _vmem_cap_bytes()
    if not force_streaming and 2 * _resident_vmem_needed(col3) <= vmem_cap:
        return _run_resident(qidx, qval, col3, top_k=top_k, num_docs=num_docs,
                             vmem_cap=vmem_cap)
    return _run_streaming(qidx, qval, col3, num_shards=num_shards,
                          rows_per_shard=rows_per_shard, top_k=top_k,
                          num_docs=num_docs, terms_per_step=terms_per_step,
                          vmem_cap=vmem_cap)


def _reference_scores(prepared, indices, values):
    """Pure-JAX reference of the module's accumulate over the stored collection."""
    num_docs = prepared["num_docs"]
    num_terms = prepared["col3"].shape[0]
    col = prepared["col3"].astype(jnp.float32).reshape(num_terms, -1)[:, :num_docs]
    if "term_scale" in prepared:
        col = col * prepared["term_scale"][:, None]
    qidx = jnp.clip(indices.reshape(-1).astype(jnp.int32), 0, num_terms - 1)
    qval = values.reshape(-1).astype(jnp.float32)
    return (col[qidx] * qval[:, None]).sum(axis=0)


# ------------------------------------------------------------------------- demo
if __name__ == "__main__":
    key = jax.random.PRNGKey(0)
    k_coll, k_mask, k_idx, k_val = jax.random.split(key, 4)

    num_docs = 1500     # collection shape[0]
    num_terms = 64      # vocabulary size (collection shape[1])
    nnz_q = 10          # nonzeros in the query
    top_k = 10

    # Deterministic synthetic "CSC" collection, densified: (num_terms, num_docs).
    dense = jax.random.uniform(k_coll, (num_terms, num_docs), jnp.float32)
    mask = jax.random.bernoulli(k_mask, 0.2, (num_terms, num_docs))
    collection = jnp.where(mask, dense, 0.0)

    # Query (as the module receives it, pre-squeeze(0)).
    q_indices = jax.random.permutation(k_idx, num_terms)[:nnz_q].reshape(1, nnz_q)
    q_values = jax.random.uniform(k_val, (1, nnz_q), jnp.float32, 0.1, 1.0)

    def check(prepared, topv, topi, atol):
        acc = _reference_scores(prepared, q_indices, q_values)
        ref_v, _ = lax.top_k(acc, top_k)
        assert jnp.allclose(topv, ref_v, atol=atol), (topv, ref_v)
        assert jnp.allclose(acc[topi], topv, atol=atol), (acc[topi], topv)

    # objective='accuracy' (float32 storage) -- matches the torch module default.
    prep_f32 = prepare_collection(collection, objective="accuracy")

    # 1) small-corpus fast path (whole collection resident in VMEM).
    topv, topi = csr_sparse_retrieval_topk(q_indices, q_values, prep_f32, top_k=top_k)
    topv, topi = jax.block_until_ready((topv, topi))
    check(prep_f32, topv, topi, atol=1e-4)

    # 2) large-corpus streaming path (scalar-prefetch-driven per-term row gathers).
    topv, topi = csr_sparse_retrieval_topk(q_indices, q_values, prep_f32, top_k=top_k,
                                           force_streaming=True)
    topv, topi = jax.block_until_ready((topv, topi))
    check(prep_f32, topv, topi, atol=1e-4)

    # 3) objective='performance' (int8 storage, per-term scale folded into weights).
    prep_i8 = prepare_collection(collection, objective="performance")
    topv, topi = csr_sparse_retrieval_topk(q_indices, q_values, prep_i8, top_k=top_k,
                                           force_streaming=True)
    topv, topi = jax.block_until_ready((topv, topi))
    check(prep_i8, topv, topi, atol=1e-3)

    print("KERNEL_OK")
</pallas_src>

<mosaic_0001>
module attributes {stable_mosaic.version = 11 : i64} {
  func.func @_resident_kernel(%arg0: i32, %arg1: memref<16xi32, #tpu.memory_space<smem>>, %arg2: memref<16xf32, #tpu.memory_space<smem>>, %arg3: memref<64x16x128xf32, #tpu.memory_space<vmem>>, %arg4: memref<1x8x128xf32, #tpu.memory_space<vmem>>, %arg5: memref<1x8x128xi32, #tpu.memory_space<vmem>>, %arg6: memref<16x128xf32, #tpu.memory_space<vmem>>) attributes {dimension_semantics = [#tpu.dimension_semantics<arbitrary>], iteration_bounds = array<i64: 1>, scalar_prefetch = 2 : i64, scratch_operands = 1 : i64, tpu.core_type = #tpu.core_type<tc>, window_params = [{pipeline_mode = #tpu.pipeline_mode<synchronous>, transform_indices = @transform_0, window_bounds = array<i64: 64, 16, 128>}, {pipeline_mode = #tpu.pipeline_mode<synchronous>, transform_indices = @transform_1, window_bounds = array<i64: 1, 8, 128>}, {pipeline_mode = #tpu.pipeline_mode<synchronous>, transform_indices = @transform_2, window_bounds = array<i64: 1, 8, 128>}]} {
    %cst = arith.constant 0.000000e+00 : f32
    %0 = vector.broadcast %cst : f32 to vector<16x128xf32>
    %c0 = arith.constant 0 : index
    %c0_0 = arith.constant 0 : index
    %1 = vector.load %arg6[%c0, %c0_0] : memref<16x128xf32, #tpu.memory_space<vmem>>, vector<16x128xf32>
    tpu.vector_store %arg6[%c0, %c0_0], %0 {strides = array<i32>} : memref<16x128xf32, #tpu.memory_space<vmem>>, vector<16x128xf32>,
    %c0_i32 = arith.constant 0 : i32
    %c16_i32 = arith.constant 16 : i32
    %2 = arith.addi %c0_i32, %c16_i32 : i32
    %c1_i32 = arith.constant 1 : i32
    scf.for %arg7 = %c0_i32 to %2 step %c1_i32  : i32 {
      %280 = arith.index_cast %arg7 : i32 to index
      %281 = memref.load %arg1[%280] : memref<16xi32, #tpu.memory_space<smem>>
      %c0_84 = arith.constant 0 : index
      %c0_85 = arith.constant 0 : index
      %282 = vector.load %arg6[%c0_84, %c0_85] : memref<16x128xf32, #tpu.memory_space<vmem>>, vector<16x128xf32>
      %283 = arith.index_cast %281 : i32 to index
      %c0_86 = arith.constant 0 : index
      %c0_87 = arith.constant 0 : index
      %284 = vector.load %arg3[%283, %c0_86, %c0_87] : memref<64x16x128xf32, #tpu.memory_space<vmem>>, vector<1x16x128xf32>
      %285 = vector.shape_cast %284 : vector<1x16x128xf32> to vector<16x128xf32>
      %286 = arith.index_cast %arg7 : i32 to index
      %287 = memref.load %arg2[%286] : memref<16xf32, #tpu.memory_space<smem>>
      %288 = vector.broadcast %287 : f32 to vector<16x128xf32>
      %289 = arith.mulf %285, %288 : vector<16x128xf32>
      %290 = arith.addf %282, %289 : vector<16x128xf32>
      %c0_88 = arith.constant 0 : index
      %c0_89 = arith.constant 0 : index
      %291 = vector.load %arg6[%c0_88, %c0_89] : memref<16x128xf32, #tpu.memory_space<vmem>>, vector<16x128xf32>
      tpu.vector_store %arg6[%c0_88, %c0_89], %290 {strides = array<i32>} : memref<16x128xf32, #tpu.memory_space<vmem>>, vector<16x128xf32>,
    }
    %c16_i32_1 = arith.constant 16 : i32
    %c0_2 = arith.constant 0 : index
    %c0_3 = arith.constant 0 : index
    %3 = vector.load %arg6[%c0_2, %c0_3] : memref<16x128xf32, #tpu.memory_space<vmem>>, vector<16x128xf32>
    %4 = tpu.iota {dimensions = array<i32: 0>} : vector<16x128xi32>
    %5 = tpu.iota {dimensions = array<i32: 1>} : vector<16x128xi32>
    %c128_i32 = arith.constant 128 : i32
    %6 = vector.broadcast %c128_i32 : i32 to vector<16x128xi32>
    %7 = arith.muli %4, %6 : vector<16x128xi32>
    %c0_i32_4 = arith.constant 0 : i32
    %8 = vector.broadcast %c0_i32_4 : i32 to vector<16x128xi32>
    %9 = arith.addi %8, %7 : vector<16x128xi32>
    %10 = arith.addi %9, %5 : vector<16x128xi32>
    %c1500_i32 = arith.constant 1500 : i32
    %11 = vector.broadcast %c1500_i32 : i32 to vector<16x128xi32>
    %12 = arith.cmpi slt, %10, %11 : vector<16x128xi32>
    %cst_5 = arith.constant 0xFF800000 : f32
    %13 = vector.broadcast %cst_5 : f32 to vector<16x128xf32>
    %14 = arith.select %12, %3, %13 : vector<16x128xi1>, vector<16x128xf32>
    %15 = tpu.iota {dimensions = array<i32: 1>} : vector<8x128xi32>
    %cst_6 = arith.constant 0xFF800000 : f32
    %16 = vector.broadcast %cst_6 : f32 to vector<8x128xf32>
    %c0_i32_7 = arith.constant 0 : i32
    %17 = vector.broadcast %c0_i32_7 : i32 to vector<8x128xi32>
    %cst_8 = arith.constant dense<0xFF800000> : vector<128xf32>
    %18 = vector.multi_reduction <maximumf>, %14, %cst_8 [0] : vector<16x128xf32> to vector<128xf32>
    %19 = vector.shape_cast %18 : vector<128xf32> to vector<1x128xf32>
    %cst_9 = arith.constant dense<0xFF800000> : vector<1xf32>
    %20 = vector.multi_reduction <maximumf>, %19, %cst_9 [1] : vector<1x128xf32> to vector<1xf32>
    %21 = vector.shape_cast %20 : vector<1xf32> to vector<1x1xf32>
    %22 = vector.broadcast %21 : vector<1x1xf32> to vector<16x128xf32>
    %23 = arith.cmpf oeq, %14, %22 : vector<16x128xf32>
    %c2048_i32 = arith.constant 2048 : i32
    %24 = vector.broadcast %c2048_i32 : i32 to vector<16x128xi32>
    %25 = arith.select %23, %10, %24 : vector<16x128xi1>, vector<16x128xi32>
    %cst_10 = arith.constant dense<2147483647> : vector<128xi32>
    %26 = vector.multi_reduction <minsi>, %25, %cst_10 [0] : vector<16x128xi32> to vector<128xi32>
    %27 = vector.shape_cast %26 : vector<128xi32> to vector<1x128xi32>
    %cst_11 = arith.constant dense<2147483647> : vector<1xi32>
    %28 = vector.multi_reduction <minsi>, %27, %cst_11 [1] : vector<1x128xi32> to vector<1xi32>
    %29 = vector.shape_cast %28 : vector<1xi32> to vector<1x1xi32>
    %c0_i32_12 = arith.constant 0 : i32
    %30 = vector.broadcast %c0_i32_12 : i32 to vector<8x128xi32>
    %31 = arith.cmpi eq, %15, %30 : vector<8x128xi32>
    %32 = vector.shape_cast %21 : vector<1x1xf32> to vector<1x1xf32>
    %33 = vector.broadcast %32 : vector<1x1xf32> to vector<8x128xf32>
    %34 = arith.select %31, %33, %16 : vector<8x128xi1>, vector<8x128xf32>
    %c0_i32_13 = arith.constant 0 : i32
    %35 = vector.broadcast %c0_i32_13 : i32 to vector<8x128xi32>
    %36 = arith.cmpi eq, %15, %35 : vector<8x128xi32>
    %37 = vector.shape_cast %29 : vector<1x1xi32> to vector<1x1xi32>
    %38 = vector.broadcast %37 : vector<1x1xi32> to vector<8x128xi32>
    %39 = arith.select %36, %38, %17 : vector<8x128xi1>, vector<8x128xi32>
    %40 = vector.broadcast %29 : vector<1x1xi32> to vector<16x128xi32>
    %41 = arith.cmpi eq, %10, %40 : vector<16x128xi32>
    %cst_14 = arith.constant 0xFF800000 : f32
    %42 = vector.broadcast %cst_14 : f32 to vector<16x128xf32>
    %43 = arith.select %41, %42, %14 : vector<16x128xi1>, vector<16x128xf32>
    %cst_15 = arith.constant dense<0xFF800000> : vector<128xf32>
    %44 = vector.multi_reduction <maximumf>, %43, %cst_15 [0] : vector<16x128xf32> to vector<128xf32>
    %45 = vector.shape_cast %44 : vector<128xf32> to vector<1x128xf32>
    %cst_16 = arith.constant dense<0xFF800000> : vector<1xf32>
    %46 = vector.multi_reduction <maximumf>, %45, %cst_16 [1] : vector<1x128xf32> to vector<1xf32>
    %47 = vector.shape_cast %46 : vector<1xf32> to vector<1x1xf32>
    %48 = vector.broadcast %47 : vector<1x1xf32> to vector<16x128xf32>
    %49 = arith.cmpf oeq, %43, %48 : vector<16x128xf32>
    %c2048_i32_17 = arith.constant 2048 : i32
    %50 = vector.broadcast %c2048_i32_17 : i32 to vector<16x128xi32>
    %51 = arith.select %49, %10, %50 : vector<16x128xi1>, vector<16x128xi32>
    %cst_18 = arith.constant dense<2147483647> : vector<128xi32>
    %52 = vector.multi_reduction <minsi>, %51, %cst_18 [0] : vector<16x128xi32> to vector<128xi32>
    %53 = vector.shape_cast %52 : vector<128xi32> to vector<1x128xi32>
    %cst_19 = arith.constant dense<2147483647> : vector<1xi32>
    %54 = vector.multi_reduction <minsi>, %53, %cst_19 [1] : vector<1x128xi32> to vector<1xi32>
    %55 = vector.shape_cast %54 : vector<1xi32> to vector<1x1xi32>
    %c1_i32_20 = arith.constant 1 : i32
    %56 = vector.broadcast %c1_i32_20 : i32 to vector<8x128xi32>
    %57 = arith.cmpi eq, %15, %56 : vector<8x128xi32>
    %58 = vector.shape_cast %47 : vector<1x1xf32> to vector<1x1xf32>
    %59 = vector.broadcast %58 : vector<1x1xf32> to vector<8x128xf32>
    %60 = arith.select %57, %59, %34 : vector<8x128xi1>, vector<8x128xf32>
    %c1_i32_21 = arith.constant 1 : i32
    %61 = vector.broadcast %c1_i32_21 : i32 to vector<8x128xi32>
    %62 = arith.cmpi eq, %15, %61 : vector<8x128xi32>
    %63 = vector.shape_cast %55 : vector<1x1xi32> to vector<1x1xi32>
    %64 = vector.broadcast %63 : vector<1x1xi32> to vector<8x128xi32>
    %65 = arith.select %62, %64, %39 : vector<8x128xi1>, vector<8x128xi32>
    %66 = vector.broadcast %55 : vector<1x1xi32> to vector<16x128xi32>
    %67 = arith.cmpi eq, %10, %66 : vector<16x128xi32>
    %cst_22 = arith.constant 0xFF800000 : f32
    %68 = vector.broadcast %cst_22 : f32 to vector<16x128xf32>
    %69 = arith.select %67, %68, %43 : vector<16x128xi1>, vector<16x128xf32>
    %cst_23 = arith.constant dense<0xFF800000> : vector<128xf32>
    %70 = vector.multi_reduction <maximumf>, %69, %cst_23 [0] : vector<16x128xf32> to vector<128xf32>
    %71 = vector.shape_cast %70 : vector<128xf32> to vector<1x128xf32>
    %cst_24 = arith.constant dense<0xFF800000> : vector<1xf32>
    %72 = vector.multi_reduction <maximumf>, %71, %cst_24 [1] : vector<1x128xf32> to vector<1xf32>
    %73 = vector.shape_cast %72 : vector<1xf32> to vector<1x1xf32>
    %74 = vector.broadcast %73 : vector<1x1xf32> to vector<16x128xf32>
    %75 = arith.cmpf oeq, %69, %74 : vector<16x128xf32>
    %c2048_i32_25 = arith.constant 2048 : i32
    %76 = vector.broadcast %c2048_i32_25 : i32 to vector<16x128xi32>
    %77 = arith.select %75, %10, %76 : vector<16x128xi1>, vector<16x128xi32>
    %cst_26 = arith.constant dense<2147483647> : vector<128xi32>
    %78 = vector.multi_reduction <minsi>, %77, %cst_26 [0] : vector<16x128xi32> to vector<128xi32>
    %79 = vector.shape_cast %78 : vector<128xi32> to vector<1x128xi32>
    %cst_27 = arith.constant dense<2147483647> : vector<1xi32>
    %80 = vector.multi_reduction <minsi>, %79, %cst_27 [1] : vector<1x128xi32> to vector<1xi32>
    %81 = vector.shape_cast %80 : vector<1xi32> to vector<1x1xi32>
    %c2_i32 = arith.constant 2 : i32
    %82 = vector.broadcast %c2_i32 : i32 to vector<8x128xi32>
    %83 = arith.cmpi eq, %15, %82 : vector<8x128xi32>
    %84 = vector.shape_cast %73 : vector<1x1xf32> to vector<1x1xf32>
    %85 = vector.broadcast %84 : vector<1x1xf32> to vector<8x128xf32>
    %86 = arith.select %83, %85, %60 : vector<8x128xi1>, vector<8x128xf32>
    %c2_i32_28 = arith.constant 2 : i32
    %87 = vector.broadcast %c2_i32_28 : i32 to vector<8x128xi32>
    %88 = arith.cmpi eq, %15, %87 : vector<8x128xi32>
    %89 = vector.shape_cast %81 : vector<1x1xi32> to vector<1x1xi32>
    %90 = vector.broadcast %89 : vector<1x1xi32> to vector<8x128xi32>
    %91 = arith.select %88, %90, %65 : vector<8x128xi1>, vector<8x128xi32>
    %92 = vector.broadcast %81 : vector<1x1xi32> to vector<16x128xi32>
    %93 = arith.cmpi eq, %10, %92 : vector<16x128xi32>
    %cst_29 = arith.constant 0xFF800000 : f32
    %94 = vector.broadcast %cst_29 : f32 to vector<16x128xf32>
    %95 = arith.select %93, %94, %69 : vector<16x128xi1>, vector<16x128xf32>
    %cst_30 = arith.constant dense<0xFF800000> : vector<128xf32>
    %96 = vector.multi_reduction <maximumf>, %95, %cst_30 [0] : vector<16x128xf32> to vector<128xf32>
    %97 = vector.shape_cast %96 : vector<128xf32> to vector<1x128xf32>
    %cst_31 = arith.constant dense<0xFF800000> : vector<1xf32>
    %98 = vector.multi_reduction <maximumf>, %97, %cst_31 [1] : vector<1x128xf32> to vector<1xf32>
    %99 = vector.shape_cast %98 : vector<1xf32> to vector<1x1xf32>
    %100 = vector.broadcast %99 : vector<1x1xf32> to vector<16x128xf32>
    %101 = arith.cmpf oeq, %95, %100 : vector<16x128xf32>
    %c2048_i32_32 = arith.constant 2048 : i32
    %102 = vector.broadcast %c2048_i32_32 : i32 to vector<16x128xi32>
    %103 = arith.select %101, %10, %102 : vector<16x128xi1>, vector<16x128xi32>
    %cst_33 = arith.constant dense<2147483647> : vector<128xi32>
    %104 = vector.multi_reduction <minsi>, %103, %cst_33 [0] : vector<16x128xi32> to vector<128xi32>
    %105 = vector.shape_cast %104 : vector<128xi32> to vector<1x128xi32>
    %cst_34 = arith.constant dense<2147483647> : vector<1xi32>
    %106 = vector.multi_reduction <minsi>, %105, %cst_34 [1] : vector<1x128xi32> to vector<1xi32>
    %107 = vector.shape_cast %106 : vector<1xi32> to vector<1x1xi32>
    %c3_i32 = arith.constant 3 : i32
    %108 = vector.broadcast %c3_i32 : i32 to vector<8x128xi32>
    %109 = arith.cmpi eq, %15, %108 : vector<8x128xi32>
    %110 = vector.shape_cast %99 : vector<1x1xf32> to vector<1x1xf32>
    %111 = vector.broadcast %110 : vector<1x1xf32> to vector<8x128xf32>
    %112 = arith.select %109, %111, %86 : vector<8x128xi1>, vector<8x128xf32>
    %c3_i32_35 = arith.constant 3 : i32
    %113 = vector.broadcast %c3_i32_35 : i32 to vector<8x128xi32>
    %114 = arith.cmpi eq, %15, %113 : vector<8x128xi32>
    %115 = vector.shape_cast %107 : vector<1x1xi32> to vector<1x1xi32>
    %116 = vector.broadcast %115 : vector<1x1xi32> to vector<8x128xi32>
    %117 = arith.select %114, %116, %91 : vector<8x128xi1>, vector<8x128xi32>
    %118 = vector.broadcast %107 : vector<1x1xi32> to vector<16x128xi32>
    %119 = arith.cmpi eq, %10, %118 : vector<16x128xi32>
    %cst_36 = arith.constant 0xFF800000 : f32
    %120 = vector.broadcast %cst_36 : f32 to vector<16x128xf32>
    %121 = arith.select %119, %120, %95 : vector<16x128xi1>, vector<16x128xf32>
    %cst_37 = arith.constant dense<0xFF800000> : vector<128xf32>
    %122 = vector.multi_reduction <maximumf>, %121, %cst_37 [0] : vector<16x128xf32> to vector<128xf32>
    %123 = vector.shape_cast %122 : vector<128xf32> to vector<1x128xf32>
    %cst_38 = arith.constant dense<0xFF800000> : vector<1xf32>
    %124 = vector.multi_reduction <maximumf>, %123, %cst_38 [1] : vector<1x128xf32> to vector<1xf32>
    %125 = vector.shape_cast %124 : vector<1xf32> to vector<1x1xf32>
    %126 = vector.broadcast %125 : vector<1x1xf32> to vector<16x128xf32>
    %127 = arith.cmpf oeq, %121, %126 : vector<16x128xf32>
    %c2048_i32_39 = arith.constant 2048 : i32
    %128 = vector.broadcast %c2048_i32_39 : i32 to vector<16x128xi32>
    %129 = arith.select %127, %10, %128 : vector<16x128xi1>, vector<16x128xi32>
    %cst_40 = arith.constant dense<2147483647> : vector<128xi32>
    %130 = vector.multi_reduction <minsi>, %129, %cst_40 [0] : vector<16x128xi32> to vector<128xi32>
    %131 = vector.shape_cast %130 : vector<128xi32> to vector<1x128xi32>
    %cst_41 = arith.constant dense<2147483647> : vector<1xi32>
    %132 = vector.multi_reduction <minsi>, %131, %cst_41 [1] : vector<1x128xi32> to vector<1xi32>
    %133 = vector.shape_cast %132 : vector<1xi32> to vector<1x1xi32>
    %c4_i32 = arith.constant 4 : i32
    %134 = vector.broadcast %c4_i32 : i32 to vector<8x128xi32>
    %135 = arith.cmpi eq, %15, %134 : vector<8x128xi32>
    %136 = vector.shape_cast %125 : vector<1x1xf32> to vector<1x1xf32>
    %137 = vector.broadcast %136 : vector<1x1xf32> to vector<8x128xf32>
    %138 = arith.select %135, %137, %112 : vector<8x128xi1>, vector<8x128xf32>
    %c4_i32_42 = arith.constant 4 : i32
    %139 = vector.broadcast %c4_i32_42 : i32 to vector<8x128xi32>
    %140 = arith.cmpi eq, %15, %139 : vector<8x128xi32>
    %141 = vector.shape_cast %133 : vector<1x1xi32> to vector<1x1xi32>
    %142 = vector.broadcast %141 : vector<1x1xi32> to vector<8x128xi32>
    %143 = arith.select %140, %142, %117 : vector<8x128xi1>, vector<8x128xi32>
    %144 = vector.broadcast %133 : vector<1x1xi32> to vector<16x128xi32>
    %145 = arith.cmpi eq, %10, %144 : vector<16x128xi32>
    %cst_43 = arith.constant 0xFF800000 : f32
    %146 = vector.broadcast %cst_43 : f32 to vector<16x128xf32>
    %147 = arith.select %145, %146, %121 : vector<16x128xi1>, vector<16x128xf32>
    %cst_44 = arith.constant dense<0xFF800000> : vector<128xf32>
    %148 = vector.multi_reduction <maximumf>, %147, %cst_44 [0] : vector<16x128xf32> to vector<128xf32>
    %149 = vector.shape_cast %148 : vector<128xf32> to vector<1x128xf32>
    %cst_45 = arith.constant dense<0xFF800000> : vector<1xf32>
    %150 = vector.multi_reduction <maximumf>, %149, %cst_45 [1] : vector<1x128xf32> to vector<1xf32>
    %151 = vector.shape_cast %150 : vector<1xf32> to vector<1x1xf32>
    %152 = vector.broadcast %151 : vector<1x1xf32> to vector<16x128xf32>
    %153 = arith.cmpf oeq, %147, %152 : vector<16x128xf32>
    %c2048_i32_46 = arith.constant 2048 : i32
    %154 = vector.broadcast %c2048_i32_46 : i32 to vector<16x128xi32>
    %155 = arith.select %153, %10, %154 : vector<16x128xi1>, vector<16x128xi32>
    %cst_47 = arith.constant dense<2147483647> : vector<128xi32>
    %156 = vector.multi_reduction <minsi>, %155, %cst_47 [0] : vector<16x128xi32> to vector<128xi32>
    %157 = vector.shape_cast %156 : vector<128xi32> to vector<1x128xi32>
    %cst_48 = arith.constant dense<2147483647> : vector<1xi32>
    %158 = vector.multi_reduction <minsi>, %157, %cst_48 [1] : vector<1x128xi32> to vector<1xi32>
    %159 = vector.shape_cast %158 : vector<1xi32> to vector<1x1xi32>
    %c5_i32 = arith.constant 5 : i32
    %160 = vector.broadcast %c5_i32 : i32 to vector<8x128xi32>
    %161 = arith.cmpi eq, %15, %160 : vector<8x128xi32>
    %162 = vector.shape_cast %151 : vector<1x1xf32> to vector<1x1xf32>
    %163 = vector.broadcast %162 : vector<1x1xf32> to vector<8x128xf32>
    %164 = arith.select %161, %163, %138 : vector<8x128xi1>, vector<8x128xf32>
    %c5_i32_49 = arith.constant 5 : i32
    %165 = vector.broadcast %c5_i32_49 : i32 to vector<8x128xi32>
    %166 = arith.cmpi eq, %15, %165 : vector<8x128xi32>
    %167 = vector.shape_cast %159 : vector<1x1xi32> to vector<1x1xi32>
    %168 = vector.broadcast %167 : vector<1x1xi32> to vector<8x128xi32>
    %169 = arith.select %166, %168, %143 : vector<8x128xi1>, vector<8x128xi32>
    %170 = vector.broadcast %159 : vector<1x1xi32> to vector<16x128xi32>
    %171 = arith.cmpi eq, %10, %170 : vector<16x128xi32>
    %cst_50 = arith.constant 0xFF800000 : f32
    %172 = vector.broadcast %cst_50 : f32 to vector<16x128xf32>
    %173 = arith.select %171, %172, %147 : vector<16x128xi1>, vector<16x128xf32>
    %cst_51 = arith.constant dense<0xFF800000> : vector<128xf32>
    %174 = vector.multi_reduction <maximumf>, %173, %cst_51 [0] : vector<16x128xf32> to vector<128xf32>
    %175 = vector.shape_cast %174 : vector<128xf32> to vector<1x128xf32>
    %cst_52 = arith.constant dense<0xFF800000> : vector<1xf32>
    %176 = vector.multi_reduction <maximumf>, %175, %cst_52 [1] : vector<1x128xf32> to vector<1xf32>
    %177 = vector.shape_cast %176 : vector<1xf32> to vector<1x1xf32>
    %178 = vector.broadcast %177 : vector<1x1xf32> to vector<16x128xf32>
    %179 = arith.cmpf oeq, %173, %178 : vector<16x128xf32>
    %c2048_i32_53 = arith.constant 2048 : i32
    %180 = vector.broadcast %c2048_i32_53 : i32 to vector<16x128xi32>
    %181 = arith.select %179, %10, %180 : vector<16x128xi1>, vector<16x128xi32>
    %cst_54 = arith.constant dense<2147483647> : vector<128xi32>
    %182 = vector.multi_reduction <minsi>, %181, %cst_54 [0] : vector<16x128xi32> to vector<128xi32>
    %183 = vector.shape_cast %182 : vector<128xi32> to vector<1x128xi32>
    %cst_55 = arith.constant dense<2147483647> : vector<1xi32>
    %184 = vector.multi_reduction <minsi>, %183, %cst_55 [1] : vector<1x128xi32> to vector<1xi32>
    %185 = vector.shape_cast %184 : vector<1xi32> to vector<1x1xi32>
    %c6_i32 = arith.constant 6 : i32
    %186 = vector.broadcast %c6_i32 : i32 to vector<8x128xi32>
    %187 = arith.cmpi eq, %15, %186 : vector<8x128xi32>
    %188 = vector.shape_cast %177 : vector<1x1xf32> to vector<1x1xf32>
    %189 = vector.broadcast %188 : vector<1x1xf32> to vector<8x128xf32>
    %190 = arith.select %187, %189, %164 : vector<8x128xi1>, vector<8x128xf32>
    %c6_i32_56 = arith.constant 6 : i32
    %191 = vector.broadcast %c6_i32_56 : i32 to vector<8x128xi32>
    %192 = arith.cmpi eq, %15, %191 : vector<8x128xi32>
    %193 = vector.shape_cast %185 : vector<1x1xi32> to vector<1x1xi32>
    %194 = vector.broadcast %193 : vector<1x1xi32> to vector<8x128xi32>
    %195 = arith.select %192, %194, %169 : vector<8x128xi1>, vector<8x128xi32>
    %196 = vector.broadcast %185 : vector<1x1xi32> to vector<16x128xi32>
    %197 = arith.cmpi eq, %10, %196 : vector<16x128xi32>
    %cst_57 = arith.constant 0xFF800000 : f32
    %198 = vector.broadcast %cst_57 : f32 to vector<16x128xf32>
    %199 = arith.select %197, %198, %173 : vector<16x128xi1>, vector<16x128xf32>
    %cst_58 = arith.constant dense<0xFF800000> : vector<128xf32>
    %200 = vector.multi_reduction <maximumf>, %199, %cst_58 [0] : vector<16x128xf32> to vector<128xf32>
    %201 = vector.shape_cast %200 : vector<128xf32> to vector<1x128xf32>
    %cst_59 = arith.constant dense<0xFF800000> : vector<1xf32>
    %202 = vector.multi_reduction <maximumf>, %201, %cst_59 [1] : vector<1x128xf32> to vector<1xf32>
    %203 = vector.shape_cast %202 : vector<1xf32> to vector<1x1xf32>
    %204 = vector.broadcast %203 : vector<1x1xf32> to vector<16x128xf32>
    %205 = arith.cmpf oeq, %199, %204 : vector<16x128xf32>
    %c2048_i32_60 = arith.constant 2048 : i32
    %206 = vector.broadcast %c2048_i32_60 : i32 to vector<16x128xi32>
    %207 = arith.select %205, %10, %206 : vector<16x128xi1>, vector<16x128xi32>
    %cst_61 = arith.constant dense<2147483647> : vector<128xi32>
    %208 = vector.multi_reduction <minsi>, %207, %cst_61 [0] : vector<16x128xi32> to vector<128xi32>
    %209 = vector.shape_cast %208 : vector<128xi32> to vector<1x128xi32>
    %cst_62 = arith.constant dense<2147483647> : vector<1xi32>
    %210 = vector.multi_reduction <minsi>, %209, %cst_62 [1] : vector<1x128xi32> to vector<1xi32>
    %211 = vector.shape_cast %210 : vector<1xi32> to vector<1x1xi32>
    %c7_i32 = arith.constant 7 : i32
    %212 = vector.broadcast %c7_i32 : i32 to vector<8x128xi32>
    %213 = arith.cmpi eq, %15, %212 : vector<8x128xi32>
    %214 = vector.shape_cast %203 : vector<1x1xf32> to vector<1x1xf32>
    %215 = vector.broadcast %214 : vector<1x1xf32> to vector<8x128xf32>
    %216 = arith.select %213, %215, %190 : vector<8x128xi1>, vector<8x128xf32>
    %c7_i32_63 = arith.constant 7 : i32
    %217 = vector.broadcast %c7_i32_63 : i32 to vector<8x128xi32>
    %218 = arith.cmpi eq, %15, %217 : vector<8x128xi32>
    %219 = vector.shape_cast %211 : vector<1x1xi32> to vector<1x1xi32>
    %220 = vector.broadcast %219 : vector<1x1xi32> to vector<8x128xi32>
    %221 = arith.select %218, %220, %195 : vector<8x128xi1>, vector<8x128xi32>
    %222 = vector.broadcast %211 : vector<1x1xi32> to vector<16x128xi32>
    %223 = arith.cmpi eq, %10, %222 : vector<16x128xi32>
    %cst_64 = arith.constant 0xFF800000 : f32
    %224 = vector.broadcast %cst_64 : f32 to vector<16x128xf32>
    %225 = arith.select %223, %224, %199 : vector<16x128xi1>, vector<16x128xf32>
    %cst_65 = arith.constant dense<0xFF800000> : vector<128xf32>
    %226 = vector.multi_reduction <maximumf>, %225, %cst_65 [0] : vector<16x128xf32> to vector<128xf32>
    %227 = vector.shape_cast %226 : vector<128xf32> to vector<1x128xf32>
    %cst_66 = arith.constant dense<0xFF800000> : vector<1xf32>
    %228 = vector.multi_reduction <maximumf>, %227, %cst_66 [1] : vector<1x128xf32> to vector<1xf32>
    %229 = vector.shape_cast %228 : vector<1xf32> to vector<1x1xf32>
    %230 = vector.broadcast %229 : vector<1x1xf32> to vector<16x128xf32>
    %231 = arith.cmpf oeq, %225, %230 : vector<16x128xf32>
    %c2048_i32_67 = arith.constant 2048 : i32
    %232 = vector.broadcast %c2048_i32_67 : i32 to vector<16x128xi32>
    %233 = arith.select %231, %10, %232 : vector<16x128xi1>, vector<16x128xi32>
    %cst_68 = arith.constant dense<2147483647> : vector<128xi32>
    %234 = vector.multi_reduction <minsi>, %233, %cst_68 [0] : vector<16x128xi32> to vector<128xi32>
    %235 = vector.shape_cast %234 : vector<128xi32> to vector<1x128xi32>
    %cst_69 = arith.constant dense<2147483647> : vector<1xi32>
    %236 = vector.multi_reduction <minsi>, %235, %cst_69 [1] : vector<1x128xi32> to vector<1xi32>
    %237 = vector.shape_cast %236 : vector<1xi32> to vector<1x1xi32>
    %c8_i32 = arith.constant 8 : i32
    %238 = vector.broadcast %c8_i32 : i32 to vector<8x128xi32>
    %239 = arith.cmpi eq, %15, %238 : vector<8x128xi32>
    %240 = vector.shape_cast %229 : vector<1x1xf32> to vector<1x1xf32>
    %241 = vector.broadcast %240 : vector<1x1xf32> to vector<8x128xf32>
    %242 = arith.select %239, %241, %216 : vector<8x128xi1>, vector<8x128xf32>
    %c8_i32_70 = arith.constant 8 : i32
    %243 = vector.broadcast %c8_i32_70 : i32 to vector<8x128xi32>
    %244 = arith.cmpi eq, %15, %243 : vector<8x128xi32>
    %245 = vector.shape_cast %237 : vector<1x1xi32> to vector<1x1xi32>
    %246 = vector.broadcast %245 : vector<1x1xi32> to vector<8x128xi32>
    %247 = arith.select %244, %246, %221 : vector<8x128xi1>, vector<8x128xi32>
    %248 = vector.broadcast %237 : vector<1x1xi32> to vector<16x128xi32>
    %249 = arith.cmpi eq, %10, %248 : vector<16x128xi32>
    %cst_71 = arith.constant 0xFF800000 : f32
    %250 = vector.broadcast %cst_71 : f32 to vector<16x128xf32>
    %251 = arith.select %249, %250, %225 : vector<16x128xi1>, vector<16x128xf32>
    %cst_72 = arith.constant dense<0xFF800000> : vector<128xf32>
    %252 = vector.multi_reduction <maximumf>, %251, %cst_72 [0] : vector<16x128xf32> to vector<128xf32>
    %253 = vector.shape_cast %252 : vector<128xf32> to vector<1x128xf32>
    %cst_73 = arith.constant dense<0xFF800000> : vector<1xf32>
    %254 = vector.multi_reduction <maximumf>, %253, %cst_73 [1] : vector<1x128xf32> to vector<1xf32>
    %255 = vector.shape_cast %254 : vector<1xf32> to vector<1x1xf32>
    %256 = vector.broadcast %255 : vector<1x1xf32> to vector<16x128xf32>
    %257 = arith.cmpf oeq, %251, %256 : vector<16x128xf32>
    %c2048_i32_74 = arith.constant 2048 : i32
    %258 = vector.broadcast %c2048_i32_74 : i32 to vector<16x128xi32>
    %259 = arith.select %257, %10, %258 : vector<16x128xi1>, vector<16x128xi32>
    %cst_75 = arith.constant dense<2147483647> : vector<128xi32>
    %260 = vector.multi_reduction <minsi>, %259, %cst_75 [0] : vector<16x128xi32> to vector<128xi32>
    %261 = vector.shape_cast %260 : vector<128xi32> to vector<1x128xi32>
    %cst_76 = arith.constant dense<2147483647> : vector<1xi32>
    %262 = vector.multi_reduction <minsi>, %261, %cst_76 [1] : vector<1x128xi32> to vector<1xi32>
    %263 = vector.shape_cast %262 : vector<1xi32> to vector<1x1xi32>
    %c9_i32 = arith.constant 9 : i32
    %264 = vector.broadcast %c9_i32 : i32 to vector<8x128xi32>
    %265 = arith.cmpi eq, %15, %264 : vector<8x128xi32>
    %266 = vector.shape_cast %255 : vector<1x1xf32> to vector<1x1xf32>
    %267 = vector.broadcast %266 : vector<1x1xf32> to vector<8x128xf32>
    %268 = arith.select %265, %267, %242 : vector<8x128xi1>, vector<8x128xf32>
    %c9_i32_77 = arith.constant 9 : i32
    %269 = vector.broadcast %c9_i32_77 : i32 to vector<8x128xi32>
    %270 = arith.cmpi eq, %15, %269 : vector<8x128xi32>
    %271 = vector.shape_cast %263 : vector<1x1xi32> to vector<1x1xi32>
    %272 = vector.broadcast %271 : vector<1x1xi32> to vector<8x128xi32>
    %273 = arith.select %270, %272, %247 : vector<8x128xi1>, vector<8x128xi32>
    %c0_78 = arith.constant 0 : index
    %c0_79 = arith.constant 0 : index
    %c0_80 = arith.constant 0 : index
    %274 = vector.load %arg4[%c0_78, %c0_79, %c0_80] : memref<1x8x128xf32, #tpu.memory_space<vmem>>, vector<1x8x128xf32>
    %275 = vector.shape_cast %274 : vector<1x8x128xf32> to vector<8x128xf32>
    %276 = vector.shape_cast %268 : vector<8x128xf32> to vector<1x8x128xf32>
    tpu.vector_store %arg4[%c0_78, %c0_79, %c0_80], %276 {strides = array<i32>} : memref<1x8x128xf32, #tpu.memory_space<vmem>>, vector<1x8x128xf32>,
    %c0_81 = arith.constant 0 : index
    %c0_82 = arith.constant 0 : index
    %c0_83 = arith.constant 0 : index
    %277 = vector.load %arg5[%c0_81, %c0_82, %c0_83] : memref<1x8x128xi32, #tpu.memory_space<vmem>>, vector<1x8x128xi32>
    %278 = vector.shape_cast %277 : vector<1x8x128xi32> to vector<8x128xi32>
    %279 = vector.shape_cast %273 : vector<8x128xi32> to vector<1x8x128xi32>
    tpu.vector_store %arg5[%c0_81, %c0_82, %c0_83], %279 {strides = array<i32>} : memref<1x8x128xi32, #tpu.memory_space<vmem>>, vector<1x8x128xi32>,
    return
  }
  func.func @transform_0(%arg0: i32, %arg1: memref<16xi32, #tpu.memory_space<smem>>, %arg2: memref<16xf32, #tpu.memory_space<smem>>) -> (i32, i32, i32) {
    %c0_i32 = arith.constant 0 : i32
    %c0_i32_0 = arith.constant 0 : i32
    %c0_i32_1 = arith.constant 0 : i32
    %c0_i32_2 = arith.constant 0 : i32
    return %c0_i32, %c0_i32_0, %c0_i32_1 : i32, i32, i32
  }
  func.func @transform_1(%arg0: i32, %arg1: memref<16xi32, #tpu.memory_space<smem>>, %arg2: memref<16xf32, #tpu.memory_space<smem>>) -> (i32, i32, i32) {
    %c0_i32 = arith.constant 0 : i32
    %c0_i32_0 = arith.constant 0 : i32
    %c0_i32_1 = arith.constant 0 : i32
    %c0_i32_2 = arith.constant 0 : i32
    return %c0_i32, %c0_i32_0, %c0_i32_1 : i32, i32, i32
  }
  func.func @transform_2(%arg0: i32, %arg1: memref<16xi32, #tpu.memory_space<smem>>, %arg2: memref<16xf32, #tpu.memory_space<smem>>) -> (i32, i32, i32) {
    %c0_i32 = arith.constant 0 : i32
    %c0_i32_0 = arith.constant 0 : i32
    %c0_i32_1 = arith.constant 0 : i32
    %c0_i32_2 = arith.constant 0 : i32
    return %c0_i32, %c0_i32_0, %c0_i32_1 : i32, i32, i32
  }
}

</mosaic_0001>

<llo_original>
// kernel: tpu_custom_call.1
$region0: #{tpu_custom_call.1}
  #allocation0 [shape = 'u32[]', space=smem, size = 0x4, offset = 0x4, fixed_abs, tag = 'smem constant byte address 0x4 - core index']
  #allocation1 [shape = 'u32[144,128]{1,0:T(1,128)}', space=vmem, size = 0x12000, scoped, tag = 'internal scratch']
  #allocation2 [shape = 'f32[16,128]{1,0:T(8,128)}', space=vmem, size = 0x2000, scoped, tag = 'scratch operand']
  #allocation3 [shape = 's32[1]{0}', space=sflag, size = 0x4, scoped, tag = 'scoped memory for tpu_custom_call.1']
  #allocation4 [shape = 'u8[512]{0}', space=smem, size = 0x200, scoped, tag = 'prefetched SMEM operand 0']
  #allocation5 [shape = 'u8[512]{0}', space=smem, size = 0x200, scoped, tag = 'prefetched SMEM operand 1']
  %s0 = inlined_call_operand.hbm [shape: s32[16], index: 0, kind: input, shape index: {}]
  %s1 = inlined_call_operand.vmem [shape: f32[16], index: 1, kind: input, shape index: {}]
  %s2 = inlined_call_operand.hbm [shape: f32[64,16,128], index: 2, kind: input, shape index: {}]
  %s3 = inlined_call_operand.hbm [shape: f32[1,8,128], index: 3, kind: output, shape index: {0}]
  %s4 = inlined_call_operand.hbm [shape: s32[1,8,128], index: 4, kind: output, shape index: {1}]
  %5 = xla_tuple %s3, %s4
  %s6 = sld [smem:[#allocation0]]
  $region33: #{tpu_custom_call.1} parent=0
    _
  %s8 = ssub.s32 1, %s6
  %s9 = scalar_select 0, %s8, %s6
  %11 = dma.hbm_to_smem %s0, 16, [#allocation4], [#allocation3]
  %s12 = sshll.u32 %s1, 4
  %s13 = int_to_ptr.vmem [resolvable:$true] %s12
  %15 = dma.vmem_to_smem %s13, 16, [#allocation5], [#allocation3]
  %16 = dma.done [#allocation3], 32
  %17 = sfence
  $region1: #{tpu_custom_call.1} parent=0
    #allocation6 [shape = 'u8[524288]{0}', space=vmem, size = 0x80000, scoped, tag = 'input window, operand 2, single buffered']
    #allocation7 [shape = 's32[1]{0}', space=sflag, size = 0x4, scoped, tag = 'scoped memory for tpu_custom_call.1']
    #allocation8 [shape = 's32[1]{0}', space=sflag, size = 0x4, scoped, tag = 'scoped memory for tpu_custom_call.1']
    #allocation9 [shape = 'u8[4096]{0}', space=vmem, size = 0x1000, scoped, tag = 'output window, operand 0, single buffered']
    #allocation10 [shape = 'u8[4096]{0}', space=vmem, size = 0x1000, scoped, tag = 'output window, operand 1, single buffered']
    #allocation11 [shape = 's32[1]{0}', space=sflag, size = 0x4, scoped, tag = 'scoped memory for tpu_custom_call.1']
    %18 = vsyncpa [#allocation7], 0
    %19 = vsyncpa [#allocation8], 0
    %20 = vsyncpa [#allocation11], 0
    // Predicated region
    $region2: #{tpu_custom_call.1} parent=1 // pred_check
      _
    $region3: #{tpu_custom_call.1} parent=1 // pred_check_branch
      %22 = sbr.rel (0) target = $region5
    $region4: #{tpu_custom_call.1} parent=1 // pred_region
      %s24 = ssub.s32 16384, 16384
      %25 = vsyncadd [#allocation7], %s24
      %s26 = sshll.u32 [#allocation6], 4
      %s27 = int_to_ptr.vmem [resolvable:$true] %s26
      %32 = dma.hbm_to_vmem [thread:$0]  %s2, 16384, %s27, [#allocation7], 128, 128, 8
    $region5: #{tpu_custom_call.1} parent=1 // pred_fallthru
      _
    // Predicated region
    $region6: #{tpu_custom_call.1} parent=1 // pred_check
      _
    $region7: #{tpu_custom_call.1} parent=1 // pred_check_branch
      %34 = sbr.rel (0) target = $region9
    $region8: #{tpu_custom_call.1} parent=1 // pred_region
      %35 = dma.done [#allocation7], 16384
    $region9: #{tpu_custom_call.1} parent=1 // pred_fallthru
      _
    %36 = vst [vmem:[#allocation2] sm:$0xff] 0.0
    %37 = vst [vmem:[#allocation2 + $0x8] sm:$0xff] 0.0
    loop: start=0, step=1, limit=16
    $region10: #{tpu_custom_call.1} parent=1 // loop_pre_header
      _
    $region11: #{tpu_custom_call.1} parent=1 // loop_header
      %s39 = sphi 0, %s43
      %p40 = scmp.ge.s32.totalorder %s39, 16
    $region12: #{tpu_custom_call.1} parent=1 // loop_header_branch
      %42 = sbr.rel (%p40) target = $region16
    $region13: #{tpu_custom_call.1} parent=1 // loop_body
      %s44 = sld [smem:[#allocation4 + %s39]]
      %v45 = vld [vmem:[#allocation2] sm:$0xff]
      %v46 = vld [vmem:[#allocation2 + $0x8] sm:$0xff]
      %s47 = smul.u32 %s44, 16
      %s48 = scalar_lea.vmem [#allocation6], %s47
      %v49 = vld [vmem:[%s48] sm:$0xff]
      %v50 = vld [vmem:[%s48 + $0x8] sm:$0xff]
      %s51 = sld [smem:[#allocation5 + %s39]]
      %v52 = vstv %s51
      %v53 = vmul.f32 %v49, %v52
      %v54 = vmul.f32 %v50, %v52
      %v55 = vadd.f32 %v45, %v53
      %v56 = vadd.f32 %v46, %v54
      %57 = vst [vmem:[#allocation2] sm:$0xff] %v55
      %58 = vst [vmem:[#allocation2 + $0x8] sm:$0xff] %v56
    $region14: #{tpu_custom_call.1} parent=1 // loop_footer
      %s43 = sadd.s32 1, %s39
    $region15: #{tpu_custom_call.1} parent=1 // loop_footer_branch
      %38 = sbr.rel target = $region11
    $region16: #{tpu_custom_call.1} parent=1 // loop_exit
      _
    %v59 = vld [vmem:[#allocation2] sm:$0xff]
    %v60 = vld [vmem:[#allocation2 + $0x8] sm:$0xff]
    %v61 = vlaneseq
    %v62 = vshrl.u32 %v61, 7
    %v63 = vadd.s32 %v62, 8
    %v64 = vlaneseq
    %v65 = vand.u32 %v64, 127
    %v66 = vmul.u32 %v62, 128
    %v67 = vmul.u32 %v63, 128
    %v68 = vadd.s32 %v66, %v65
    %v69 = vadd.s32 %v67, %v65
    %vm70 = vcmp.lt.s32.totalorder %v68, 1500
    %vm71 = vcmp.lt.s32.totalorder %v69, 1500
    %v72 = vsel %vm70, %v59, -inf
    %v73 = vsel %vm71, %v60, -inf
    %v74 = vmax.f32 %v72, %v73
    %v75 = vrot.slane %v74, 4
    %v76 = vmax.f32 %v74, %v75
    %v77 = vrot.slane %v76, 2
    %v78 = vmax.f32 %v76, %v77
    %v79 = vrot.slane %v78, 1
    %v80 = vmax.f32 %v78, %v79
    %81 = vmax.xlane.f32.xlu0 %v80
    %v82 = vpop.xlane.xlu0 %81
    %vm83 = vcmp.eq.f32.partialorder %v72, %v82
    %vm84 = vcmp.eq.f32.partialorder %v73, %v82
    %v85 = vsel %vm83, %v68, 2048
    %v86 = vsel %vm84, %v69, 2048
    %vm87 = vcmp.lt.s32.totalorder %v85, %v86
    %v88 = vsel %vm87, %v85, %v86
    %v89 = vrot.slane %v88, 4
    %vm90 = vcmp.lt.s32.totalorder %v88, %v89
    %v91 = vsel %vm90, %v88, %v89
    %v92 = vrot.slane %v91, 2
    %vm93 = vcmp.lt.s32.totalorder %v91, %v92
    %v94 = vsel %vm93, %v91, %v92
    %v95 = vrot.slane %v94, 1
    %vm96 = vcmp.lt.s32.totalorder %v94, %v95
    %v97 = vsel %vm96, %v94, %v95
    %v98 = vand.u32 %v97, 65535
    %v99 = vshra.s32 %v97, 16
    %v100 = vcvt.s32.f32 %v98
    %v101 = vcvt.s32.f32 %v99
    %102 = vmin.xlane.f32.xlu0 %v101
    %v103 = vpop.xlane.xlu0 %102
    %vm104 = vcmp.eq.f32.partialorder %v101, %v103
    %v105 = vsel %vm104, %v100, inf
    %106 = vmin.xlane.f32.xlu0 %v105
    %v107 = vpop.xlane.xlu0 %106
    %v108 = vcvt.f32.s32 %v107
    %v109 = vcvt.f32.s32 %v103
    %v110 = vshll.u32 %v109, 16
    %v111 = vadd.s32 %v110, %v108
    %vm112 = vcmp.eq.s32.totalorder %v65, 0
    %v113 = vsel %vm112, %v82, -inf
    %v114 = vsel %vm112, %v111, 0
    %vm115 = vcmp.eq.s32.totalorder %v68, %v111
    %vm116 = vcmp.eq.s32.totalorder %v69, %v111
    %v117 = vsel %vm115, -inf, %v72
    %v118 = vsel %vm116, -inf, %v73
    %v119 = vmax.f32 %v117, %v118
    %v120 = vrot.slane %v119, 4
    %v121 = vmax.f32 %v119, %v120
    %v122 = vrot.slane %v121, 2
    %v123 = vmax.f32 %v121, %v122
    %v124 = vrot.slane %v123, 1
    %v125 = vmax.f32 %v123, %v124
    %126 = vmax.xlane.f32.xlu0 %v125
    %v127 = vpop.xlane.xlu0 %126
    %vm128 = vcmp.eq.f32.partialorder %v117, %v127
    %vm129 = vcmp.eq.f32.partialorder %v118, %v127
    %v130 = vsel %vm128, %v68, 2048
    %v131 = vsel %vm129, %v69, 2048
    %vm132 = vcmp.lt.s32.totalorder %v130, %v131
    %v133 = vsel %vm132, %v130, %v131
    %v134 = vrot.slane %v133, 4
    %vm135 = vcmp.lt.s32.totalorder %v133, %v134
    %v136 = vsel %vm135, %v133, %v134
    %v137 = vrot.slane %v136, 2
    %vm138 = vcmp.lt.s32.totalorder %v136, %v137
    %v139 = vsel %vm138, %v136, %v137
    %v140 = vrot.slane %v139, 1
    %vm141 = vcmp.lt.s32.totalorder %v139, %v140
    %v142 = vsel %vm141, %v139, %v140
    %v143 = vand.u32 %v142, 65535
    %v144 = vshra.s32 %v142, 16
    %v145 = vcvt.s32.f32 %v143
    %v146 = vcvt.s32.f32 %v144
    %147 = vmin.xlane.f32.xlu0 %v146
    %v148 = vpop.xlane.xlu0 %147
    %vm149 = vcmp.eq.f32.partialorder %v146, %v148
    %v150 = vsel %vm149, %v145, inf
    %151 = vmin.xlane.f32.xlu0 %v150
    %v152 = vpop.xlane.xlu0 %151
    %v153 = vcvt.f32.s32 %v152
    %v154 = vcvt.f32.s32 %v148
    %v155 = vshll.u32 %v154, 16
    %v156 = vadd.s32 %v155, %v153
    %vm157 = vcmp.eq.s32.totalorder %v65, 1
    %v158 = vsel %vm157, %v127, %v113
    %v159 = vsel %vm157, %v156, %v114
    %vm160 = vcmp.eq.s32.totalorder %v68, %v156
    %vm161 = vcmp.eq.s32.totalorder %v69, %v156
    %v162 = vsel %vm160, -inf, %v117
    %v163 = vsel %vm161, -inf, %v118
    %v164 = vmax.f32 %v162, %v163
    %v165 = vrot.slane %v164, 4
    %v166 = vmax.f32 %v164, %v165
    %v167 = vrot.slane %v166, 2
    %v168 = vmax.f32 %v166, %v167
    %v169 = vrot.slane %v168, 1
    %v170 = vmax.f32 %v168, %v169
    %171 = vmax.xlane.f32.xlu0 %v170
    %v172 = vpop.xlane.xlu0 %171
    %vm173 = vcmp.eq.f32.partialorder %v162, %v172
    %vm174 = vcmp.eq.f32.partialorder %v163, %v172
    %v175 = vsel %vm173, %v68, 2048
    %v176 = vsel %vm174, %v69, 2048
    %vm177 = vcmp.lt.s32.totalorder %v175, %v176
    %v178 = vsel %vm177, %v175, %v176
    %v179 = vrot.slane %v178, 4
    %vm180 = vcmp.lt.s32.totalorder %v178, %v179
    %v181 = vsel %vm180, %v178, %v179
    %v182 = vrot.slane %v181, 2
    %vm183 = vcmp.lt.s32.totalorder %v181, %v182
    %v184 = vsel %vm183, %v181, %v182
    %v185 = vrot.slane %v184, 1
    %vm186 = vcmp.lt.s32.totalorder %v184, %v185
    %v187 = vsel %vm186, %v184, %v185
    %v188 = vand.u32 %v187, 65535
    %v189 = vshra.s32 %v187, 16
    %v190 = vcvt.s32.f32 %v188
    %v191 = vcvt.s32.f32 %v189
    %192 = vmin.xlane.f32.xlu0 %v191
    %v193 = vpop.xlane.xlu0 %192
    %vm194 = vcmp.eq.f32.partialorder %v191, %v193
    %v195 = vsel %vm194, %v190, inf
    %196 = vmin.xlane.f32.xlu0 %v195
    %v197 = vpop.xlane.xlu0 %196
    %v198 = vcvt.f32.s32 %v197
    %v199 = vcvt.f32.s32 %v193
    %v200 = vshll.u32 %v199, 16
    %v201 = vadd.s32 %v200, %v198
    %vm202 = vcmp.eq.s32.totalorder %v65, 2
    %v203 = vsel %vm202, %v172, %v158
    %v204 = vsel %vm202, %v201, %v159
    %vm205 = vcmp.eq.s32.totalorder %v68, %v201
    %vm206 = vcmp.eq.s32.totalorder %v69, %v201
    %v207 = vsel %vm205, -inf, %v162
    %v208 = vsel %vm206, -inf, %v163
    %v209 = vmax.f32 %v207, %v208
    %v210 = vrot.slane %v209, 4
    %v211 = vmax.f32 %v209, %v210
    %v212 = vrot.slane %v211, 2
    %v213 = vmax.f32 %v211, %v212
    %v214 = vrot.slane %v213, 1
    %v215 = vmax.f32 %v213, %v214
    %216 = vmax.xlane.f32.xlu0 %v215
    %v217 = vpop.xlane.xlu0 %216
    %vm218 = vcmp.eq.f32.partialorder %v207, %v217
    %vm219 = vcmp.eq.f32.partialorder %v208, %v217
    %v220 = vsel %vm218, %v68, 2048
    %v221 = vsel %vm219, %v69, 2048
    %vm222 = vcmp.lt.s32.totalorder %v220, %v221
    %v223 = vsel %vm222, %v220, %v221
    %v224 = vrot.slane %v223, 4
    %vm225 = vcmp.lt.s32.totalorder %v223, %v224
    %v226 = vsel %vm225, %v223, %v224
    %v227 = vrot.slane %v226, 2
    %vm228 = vcmp.lt.s32.totalorder %v226, %v227
    %v229 = vsel %vm228, %v226, %v227
    %v230 = vrot.slane %v229, 1
    %vm231 = vcmp.lt.s32.totalorder %v229, %v230
    %v232 = vsel %vm231, %v229, %v230
    %v233 = vand.u32 %v232, 65535
    %v234 = vshra.s32 %v232, 16
    %v235 = vcvt.s32.f32 %v233
    %v236 = vcvt.s32.f32 %v234
    %237 = vmin.xlane.f32.xlu0 %v236
    %v238 = vpop.xlane.xlu0 %237
    %vm239 = vcmp.eq.f32.partialorder %v236, %v238
    %v240 = vsel %vm239, %v235, inf
    %241 = vmin.xlane.f32.xlu0 %v240
    %v242 = vpop.xlane.xlu0 %241
    %v243 = vcvt.f32.s32 %v242
    %v244 = vcvt.f32.s32 %v238
    %v245 = vshll.u32 %v244, 16
    %v246 = vadd.s32 %v245, %v243
    %vm247 = vcmp.eq.s32.totalorder %v65, 3
    %v248 = vsel %vm247, %v217, %v203
    %v249 = vsel %vm247, %v246, %v204
    %vm250 = vcmp.eq.s32.totalorder %v68, %v246
    %vm251 = vcmp.eq.s32.totalorder %v69, %v246
    %v252 = vsel %vm250, -inf, %v207
    %v253 = vsel %vm251, -inf, %v208
    %v254 = vmax.f32 %v252, %v253
    %v255 = vrot.slane %v254, 4
    %v256 = vmax.f32 %v254, %v255
    %v257 = vrot.slane %v256, 2
    %v258 = vmax.f32 %v256, %v257
    %v259 = vrot.slane %v258, 1
    %v260 = vmax.f32 %v258, %v259
    %261 = vmax.xlane.f32.xlu0 %v260
    %v262 = vpop.xlane.xlu0 %261
    %vm263 = vcmp.eq.f32.partialorder %v252, %v262
    %vm264 = vcmp.eq.f32.partialorder %v253, %v262
    %v265 = vsel %vm263, %v68, 2048
    %v266 = vsel %vm264, %v69, 2048
    %vm267 = vcmp.lt.s32.totalorder %v265, %v266
    %v268 = vsel %vm267, %v265, %v266
    %v269 = vrot.slane %v268, 4
    %vm270 = vcmp.lt.s32.totalorder %v268, %v269
    %v271 = vsel %vm270, %v268, %v269
    %v272 = vrot.slane %v271, 2
    %vm273 = vcmp.lt.s32.totalorder %v271, %v272
    %v274 = vsel %vm273, %v271, %v272
    %v275 = vrot.slane %v274, 1
    %vm276 = vcmp.lt.s32.totalorder %v274, %v275
    %v277 = vsel %vm276, %v274, %v275
    %v278 = vand.u32 %v277, 65535
    %v279 = vshra.s32 %v277, 16
    %v280 = vcvt.s32.f32 %v278
    %v281 = vcvt.s32.f32 %v279
    %282 = vmin.xlane.f32.xlu0 %v281
    %v283 = vpop.xlane.xlu0 %282
    %vm284 = vcmp.eq.f32.partialorder %v281, %v283
    %v285 = vsel %vm284, %v280, inf
    %286 = vmin.xlane.f32.xlu0 %v285
    %v287 = vpop.xlane.xlu0 %286
    %v288 = vcvt.f32.s32 %v287
    %v289 = vcvt.f32.s32 %v283
    %v290 = vshll.u32 %v289, 16
    %v291 = vadd.s32 %v290, %v288
    %vm292 = vcmp.eq.s32.totalorder %v65, 4
    %v293 = vsel %vm292, %v262, %v248
    %v294 = vsel %vm292, %v291, %v249
    %vm295 = vcmp.eq.s32.totalorder %v68, %v291
    %vm296 = vcmp.eq.s32.totalorder %v69, %v291
    %v297 = vsel %vm295, -inf, %v252
    %v298 = vsel %vm296, -inf, %v253
    %v299 = vmax.f32 %v297, %v298
    %v300 = vrot.slane %v299, 4
    %v301 = vmax.f32 %v299, %v300
    %v302 = vrot.slane %v301, 2
    %v303 = vmax.f32 %v301, %v302
    %v304 = vrot.slane %v303, 1
    %v305 = vmax.f32 %v303, %v304
    %306 = vmax.xlane.f32.xlu0 %v305
    %v307 = vpop.xlane.xlu0 %306
    %vm308 = vcmp.eq.f32.partialorder %v297, %v307
    %vm309 = vcmp.eq.f32.partialorder %v298, %v307
    %v310 = vsel %vm308, %v68, 2048
    %v311 = vsel %vm309, %v69, 2048
    %vm312 = vcmp.lt.s32.totalorder %v310, %v311
    %v313 = vsel %vm312, %v310, %v311
    %v314 = vrot.slane %v313, 4
    %vm315 = vcmp.lt.s32.totalorder %v313, %v314
    %v316 = vsel %vm315, %v313, %v314
    %v317 = vrot.slane %v316, 2
    %vm318 = vcmp.lt.s32.totalorder %v316, %v317
    %v319 = vsel %vm318, %v316, %v317
    %v320 = vrot.slane %v319, 1
    %vm321 = vcmp.lt.s32.totalorder %v319, %v320
    %v322 = vsel %vm321, %v319, %v320
    %v323 = vand.u32 %v322, 65535
    %v324 = vshra.s32 %v322, 16
    %v325 = vcvt.s32.f32 %v323
    %v326 = vcvt.s32.f32 %v324
    %327 = vmin.xlane.f32.xlu0 %v326
    %v328 = vpop.xlane.xlu0 %327
    %vm329 = vcmp.eq.f32.partialorder %v326, %v328
    %v330 = vsel %vm329, %v325, inf
    %331 = vmin.xlane.f32.xlu0 %v330
    %v332 = vpop.xlane.xlu0 %331
    %v333 = vcvt.f32.s32 %v332
    %v334 = vcvt.f32.s32 %v328
    %v335 = vshll.u32 %v334, 16
    %v336 = vadd.s32 %v335, %v333
    %vm337 = vcmp.eq.s32.totalorder %v65, 5
    %v338 = vsel %vm337, %v307, %v293
    %v339 = vsel %vm337, %v336, %v294
    %vm340 = vcmp.eq.s32.totalorder %v68, %v336
    %vm341 = vcmp.eq.s32.totalorder %v69, %v336
    %v342 = vsel %vm340, -inf, %v297
    %v343 = vsel %vm341, -inf, %v298
    %v344 = vmax.f32 %v342, %v343
    %v345 = vrot.slane %v344, 4
    %v346 = vmax.f32 %v344, %v345
    %v347 = vrot.slane %v346, 2
    %v348 = vmax.f32 %v346, %v347
    %v349 = vrot.slane %v348, 1
    %v350 = vmax.f32 %v348, %v349
    %351 = vmax.xlane.f32.xlu0 %v350
    %v352 = vpop.xlane.xlu0 %351
    %vm353 = vcmp.eq.f32.partialorder %v342, %v352
    %vm354 = vcmp.eq.f32.partialorder %v343, %v352
    %v355 = vsel %vm353, %v68, 2048
    %v356 = vsel %vm354, %v69, 2048
    %vm357 = vcmp.lt.s32.totalorder %v355, %v356
    %v358 = vsel %vm357, %v355, %v356
    %v359 = vrot.slane %v358, 4
    %vm360 = vcmp.lt.s32.totalorder %v358, %v359
    %v361 = vsel %vm360, %v358, %v359
    %v362 = vrot.slane %v361, 2
    %vm363 = vcmp.lt.s32.totalorder %v361, %v362
    %v364 = vsel %vm363, %v361, %v362
    %v365 = vrot.slane %v364, 1
    %vm366 = vcmp.lt.s32.totalorder %v364, %v365
    %v367 = vsel %vm366, %v364, %v365
    %v368 = vand.u32 %v367, 65535
    %v369 = vshra.s32 %v367, 16
    %v370 = vcvt.s32.f32 %v368
    %v371 = vcvt.s32.f32 %v369
    %372 = vmin.xlane.f32.xlu0 %v371
    %v373 = vpop.xlane.xlu0 %372
    %vm374 = vcmp.eq.f32.partialorder %v371, %v373
    %v375 = vsel %vm374, %v370, inf
    %376 = vmin.xlane.f32.xlu0 %v375
    %v377 = vpop.xlane.xlu0 %376
    %v378 = vcvt.f32.s32 %v377
    %v379 = vcvt.f32.s32 %v373
    %v380 = vshll.u32 %v379, 16
    %v381 = vadd.s32 %v380, %v378
    %vm382 = vcmp.eq.s32.totalorder %v65, 6
    %v383 = vsel %vm382, %v352, %v338
    %v384 = vsel %vm382, %v381, %v339
    %vm385 = vcmp.eq.s32.totalorder %v68, %v381
    %vm386 = vcmp.eq.s32.totalorder %v69, %v381
    %v387 = vsel %vm385, -inf, %v342
    %v388 = vsel %vm386, -inf, %v343
    %v389 = vmax.f32 %v387, %v388
    %v390 = vrot.slane %v389, 4
    %v391 = vmax.f32 %v389, %v390
    %v392 = vrot.slane %v391, 2
    %v393 = vmax.f32 %v391, %v392
    %v394 = vrot.slane %v393, 1
    %v395 = vmax.f32 %v393, %v394
    %396 = vmax.xlane.f32.xlu0 %v395
    %v397 = vpop.xlane.xlu0 %396
    %vm398 = vcmp.eq.f32.partialorder %v387, %v397
    %vm399 = vcmp.eq.f32.partialorder %v388, %v397
    %v400 = vsel %vm398, %v68, 2048
    %v401 = vsel %vm399, %v69, 2048
    %vm402 = vcmp.lt.s32.totalorder %v400, %v401
    %v403 = vsel %vm402, %v400, %v401
    %v404 = vrot.slane %v403, 4
    %vm405 = vcmp.lt.s32.totalorder %v403, %v404
    %v406 = vsel %vm405, %v403, %v404
    %v407 = vrot.slane %v406, 2
    %vm408 = vcmp.lt.s32.totalorder %v406, %v407
    %v409 = vsel %vm408, %v406, %v407
    %v410 = vrot.slane %v409, 1
    %vm411 = vcmp.lt.s32.totalorder %v409, %v410
    %v412 = vsel %vm411, %v409, %v410
    %v413 = vand.u32 %v412, 65535
    %v414 = vshra.s32 %v412, 16
    %v415 = vcvt.s32.f32 %v413
    %v416 = vcvt.s32.f32 %v414
    %417 = vmin.xlane.f32.xlu0 %v416
    %v418 = vpop.xlane.xlu0 %417
    %vm419 = vcmp.eq.f32.partialorder %v416, %v418
    %v420 = vsel %vm419, %v415, inf
    %421 = vmin.xlane.f32.xlu0 %v420
    %v422 = vpop.xlane.xlu0 %421
    %v423 = vcvt.f32.s32 %v422
    %v424 = vcvt.f32.s32 %v418
    %v425 = vshll.u32 %v424, 16
    %v426 = vadd.s32 %v425, %v423
    %vm427 = vcmp.eq.s32.totalorder %v65, 7
    %v428 = vsel %vm427, %v397, %v383
    %v429 = vsel %vm427, %v426, %v384
    %vm430 = vcmp.eq.s32.totalorder %v68, %v426
    %vm431 = vcmp.eq.s32.totalorder %v69, %v426
    %v432 = vsel %vm430, -inf, %v387
    %v433 = vsel %vm431, -inf, %v388
    %v434 = vmax.f32 %v432, %v433
    %v435 = vrot.slane %v434, 4
    %v436 = vmax.f32 %v434, %v435
    %v437 = vrot.slane %v436, 2
    %v438 = vmax.f32 %v436, %v437
    %v439 = vrot.slane %v438, 1
    %v440 = vmax.f32 %v438, %v439
    %441 = vmax.xlane.f32.xlu0 %v440
    %v442 = vpop.xlane.xlu0 %441
    %vm443 = vcmp.eq.f32.partialorder %v432, %v442
    %vm444 = vcmp.eq.f32.partialorder %v433, %v442
    %v445 = vsel %vm443, %v68, 2048
    %v446 = vsel %vm444, %v69, 2048
    %vm447 = vcmp.lt.s32.totalorder %v445, %v446
    %v448 = vsel %vm447, %v445, %v446
    %v449 = vrot.slane %v448, 4
    %vm450 = vcmp.lt.s32.totalorder %v448, %v449
    %v451 = vsel %vm450, %v448, %v449
    %v452 = vrot.slane %v451, 2
    %vm453 = vcmp.lt.s32.totalorder %v451, %v452
    %v454 = vsel %vm453, %v451, %v452
    %v455 = vrot.slane %v454, 1
    %vm456 = vcmp.lt.s32.totalorder %v454, %v455
    %v457 = vsel %vm456, %v454, %v455
    %v458 = vand.u32 %v457, 65535
    %v459 = vshra.s32 %v457, 16
    %v460 = vcvt.s32.f32 %v458
    %v461 = vcvt.s32.f32 %v459
    %462 = vmin.xlane.f32.xlu0 %v461
    %v463 = vpop.xlane.xlu0 %462
    %vm464 = vcmp.eq.f32.partialorder %v461, %v463
    %v465 = vsel %vm464, %v460, inf
    %466 = vmin.xlane.f32.xlu0 %v465
    %v467 = vpop.xlane.xlu0 %466
    %v468 = vcvt.f32.s32 %v467
    %v469 = vcvt.f32.s32 %v463
    %v470 = vshll.u32 %v469, 16
    %v471 = vadd.s32 %v470, %v468
    %vm472 = vcmp.eq.s32.totalorder %v65, 8
    %v473 = vsel %vm472, %v442, %v428
    %v474 = vsel %vm472, %v471, %v429
    %vm475 = vcmp.eq.s32.totalorder %v68, %v471
    %vm476 = vcmp.eq.s32.totalorder %v69, %v471
    %v477 = vsel %vm475, -inf, %v432
    %v478 = vsel %vm476, -inf, %v433
    %v479 = vmax.f32 %v477, %v478
    %v480 = vrot.slane %v479, 4
    %v481 = vmax.f32 %v479, %v480
    %v482 = vrot.slane %v481, 2
    %v483 = vmax.f32 %v481, %v482
    %v484 = vrot.slane %v483, 1
    %v485 = vmax.f32 %v483, %v484
    %486 = vmax.xlane.f32.xlu0 %v485
    %v487 = vpop.xlane.xlu0 %486
    %vm488 = vcmp.eq.f32.partialorder %v477, %v487
    %vm489 = vcmp.eq.f32.partialorder %v478, %v487
    %v490 = vsel %vm488, %v68, 2048
    %v491 = vsel %vm489, %v69, 2048
    %vm492 = vcmp.lt.s32.totalorder %v490, %v491
    %v493 = vsel %vm492, %v490, %v491
    %v494 = vrot.slane %v493, 4
    %vm495 = vcmp.lt.s32.totalorder %v493, %v494
    %v496 = vsel %vm495, %v493, %v494
    %v497 = vrot.slane %v496, 2
    %vm498 = vcmp.lt.s32.totalorder %v496, %v497
    %v499 = vsel %vm498, %v496, %v497
    %v500 = vrot.slane %v499, 1
    %vm501 = vcmp.lt.s32.totalorder %v499, %v500
    %v502 = vsel %vm501, %v499, %v500
    %v503 = vand.u32 %v502, 65535
    %v504 = vshra.s32 %v502, 16
    %v505 = vcvt.s32.f32 %v503
    %v506 = vcvt.s32.f32 %v504
    %507 = vmin.xlane.f32.xlu0 %v506
    %v508 = vpop.xlane.xlu0 %507
    %vm509 = vcmp.eq.f32.partialorder %v506, %v508
    %v510 = vsel %vm509, %v505, inf
    %511 = vmin.xlane.f32.xlu0 %v510
    %v512 = vpop.xlane.xlu0 %511
    %v513 = vcvt.f32.s32 %v512
    %v514 = vcvt.f32.s32 %v508
    %v515 = vshll.u32 %v514, 16
    %v516 = vadd.s32 %v515, %v513
    %vm517 = vcmp.eq.s32.totalorder %v65, 9
    %v518 = vsel %vm517, %v487, %v473
    %v519 = vsel %vm517, %v516, %v474
    %520 = vst [vmem:[#allocation9] sm:$0xff] %v518
    %521 = vst [vmem:[#allocation10] sm:$0xff] %v519
    // Predicated region
    $region17: #{tpu_custom_call.1} parent=1 // pred_check
      _
    $region18: #{tpu_custom_call.1} parent=1 // pred_check_branch
      %523 = sbr.rel (0) target = $region20
    $region19: #{tpu_custom_call.1} parent=1 // pred_region
      %s525 = ssub.s32 128, 128
      %526 = vsyncadd [#allocation8], %s525
      %s528 = sshll.u32 [#allocation9], 4
      %s529 = int_to_ptr.vmem [resolvable:$true] %s528
      %531 = dma.vmem_to_hbm [thread:$0]  %s529, 128, %s3, [#allocation8]
    $region20: #{tpu_custom_call.1} parent=1 // pred_fallthru
      _
    // Predicated region
    $region21: #{tpu_custom_call.1} parent=1 // pred_check
      _
    $region22: #{tpu_custom_call.1} parent=1 // pred_check_branch
      %533 = sbr.rel (0) target = $region24
    $region23: #{tpu_custom_call.1} parent=1 // pred_region
      %s535 = ssub.s32 128, 128
      %536 = vsyncadd [#allocation11], %s535
      %s538 = sshll.u32 [#allocation10], 4
      %s539 = int_to_ptr.vmem [resolvable:$true] %s538
      %541 = dma.vmem_to_hbm [thread:$0]  %s539, 128, %s4, [#allocation11]
    $region24: #{tpu_custom_call.1} parent=1 // pred_fallthru
      _
    // Predicated region
    $region25: #{tpu_custom_call.1} parent=1 // pred_check
      _
    $region26: #{tpu_custom_call.1} parent=1 // pred_check_branch
      %543 = sbr.rel (0) target = $region28
    $region27: #{tpu_custom_call.1} parent=1 // pred_region
      %544 = dma.done [#allocation8], 128
    $region28: #{tpu_custom_call.1} parent=1 // pred_fallthru
      _
    // Predicated region
    $region29: #{tpu_custom_call.1} parent=1 // pred_check
      _
    $region30: #{tpu_custom_call.1} parent=1 // pred_check_branch
      %546 = sbr.rel (0) target = $region32
    $region31: #{tpu_custom_call.1} parent=1 // pred_region
      %547 = dma.done [#allocation11], 128
    $region32: #{tpu_custom_call.1} parent=1 // pred_fallthru
      _
    %548 = vsyncpa [#allocation7], 1
    %549 = vsyncpa [#allocation8], 1
    %550 = vsyncpa [#allocation11], 1

</llo_original>
